<compile_context>
chip_gen: v5e
topology: v5e:2x2
jax: 0.10.0
libtpu: 0.0.40
codegen_flags: <defaults>
</compile_context>

<pallas_src>
import functools

import jax
import jax.numpy as jnp
from jax import lax
from jax.experimental import pallas as pl
from jax.experimental.pallas import tpu as pltpu


def _moving_avg_kernel(x_ref, o_ref, xp_ref, *maybe_sp, kernel_size, stride, pad,
                       seq_len, out_len, presum, chunk_rows):
    """x_ref: (Bb, L, cols) block.  o_ref: (Bb, out_len, cols) block.
    xp_ref: (Lp, cols) scratch in the input dtype (edge-replicated padded series).
    maybe_sp: optional (Lp - presum + 1, cols) f32 scratch of radix-`presum` presums.

    out[b, t, c] = mean_{w in [0, k)} xp_b[t * stride + w, c].
    """
    k = kernel_size
    nb = x_ref.shape[0]
    cols = x_ref.shape[-1]
    padded_len = seq_len + 2 * pad
    inv_k = jnp.float32(1.0 / k)
    CH = chunk_rows
    n_chunks = -(-out_len // CH)
    n_full = k // presum
    rem = k - n_full * presum
    sp_ref = maybe_sp[0] if presum > 1 else None

    for b in range(nb):                        # static, small batch block
        # ---- edge-replication padding into VMEM scratch (input dtype) -------------
        xp_ref[pl.ds(pad, seq_len), :] = x_ref[b]
        if pad > 0:
            first = x_ref[b, pl.ds(0, 1), :]
            last = x_ref[b, pl.ds(seq_len - 1, 1), :]
            xp_ref[pl.ds(0, pad), :] = jnp.broadcast_to(first, (pad, cols))
            xp_ref[pl.ds(pad + seq_len, pad), :] = jnp.broadcast_to(last, (pad, cols))

        # ---- radix-`presum` presums (f32): S[t] = sum_{i<presum} xp[t+i] ----------
        if presum > 1:
            n_sp = padded_len - presum + 1
            s = xp_ref[pl.ds(0, n_sp), :].astype(jnp.float32)
            for i in range(1, presum):
                s = s + xp_ref[pl.ds(i, n_sp), :].astype(jnp.float32)
            sp_ref[pl.ds(0, n_sp), :] = s

        # ---- per-chunk register-resident accumulation -----------------------------
        def compute_chunk(t0):
            acc = jnp.zeros((CH, cols), jnp.float32)
            if stride == 1:
                if presum > 1:
                    if n_full > 32:
                        def body(j, a):
                            return a + sp_ref[pl.ds(t0 + j * presum, CH), :]
                        acc = lax.fori_loop(0, n_full, body, acc, unroll=8)
                    else:
                        for j in range(n_full):
                            acc = acc + sp_ref[pl.ds(t0 + j * presum, CH), :]
                    for i in range(rem):
                        acc = acc + xp_ref[pl.ds(t0 + n_full * presum + i, CH),
                                           :].astype(jnp.float32)
                else:
                    if k > 32:
                        def body(w, a):
                            return a + xp_ref[pl.ds(t0 + w, CH), :].astype(jnp.float32)
                        acc = lax.fori_loop(0, k, body, acc, unroll=8)
                    else:
                        for w in range(k):
                            acc = acc + xp_ref[pl.ds(t0 + w, CH), :].astype(jnp.float32)
            else:
                # stride > 1: k static strided window loads (rare path; stride is
                # always 1 in Autoformer-style series decomposition).
                for w in range(k):
                    acc = acc + xp_ref[pl.ds(t0 * stride + w, CH, stride=stride),
                                       :].astype(jnp.float32)
            o_ref[b, pl.ds(t0, CH), :] = (acc * inv_k).astype(o_ref.dtype)

        if stride != 1 or n_chunks <= 16:
            # Fully static chunk starts (tail chunk clamped so it stays in bounds;
            # the overlapping rows are simply rewritten with identical values).
            for c in range(n_chunks):
                compute_chunk(min(c * CH, out_len - CH))
        else:
            def chunk_body(c, carry):
                compute_chunk(jnp.minimum(c * CH, out_len - CH))
                return carry
            lax.fori_loop(0, n_chunks, chunk_body, 0)


def _vmem_capacity_bytes():
    try:
        cap = getattr(pltpu.get_tpu_info(), "vmem_capacity_bytes", None)
        if cap:
            return int(cap)
    except Exception:
        pass
    return 128 * 1024 * 1024


def _choose_tiling(n_batch, seq_len, n_cols, padded_len, out_len, itemsize, presum):
    capacity = _vmem_capacity_bytes()
    budget = min(capacity // 4, 32 * 1024 * 1024)    # per-step working-set target

    def step_bytes(bb, tile):
        per_col = (2 * bb * seq_len * itemsize           # double-buffered input block
                   + 2 * bb * out_len * itemsize         # double-buffered output block
                   + padded_len * itemsize)              # padded scratch (input dtype)
        if presum > 1:
            per_col += (padded_len - presum + 1) * 4     # f32 presum scratch
        return tile * per_col

    # Lane tile: full dim when small, else a multiple of 128 capped at 1024 (keeps the
    # register-resident 8-row f32 chunk accumulator at <= 8 vregs per chunk).
    if n_cols <= 128:
        tile = n_cols
    else:
        tile = (min(n_cols, 1024) // 128) * 128
        while tile > 128 and step_bytes(1, tile) > budget:
            tile -= 128

    # Batch block: largest divisor of n_batch within the VMEM budget whose input block
    # stays <= ~2 MiB (per-step DMA well above the ~0.35 us grid-step overhead).
    bb = 1
    for d in range(1, n_batch + 1):
        if n_batch % d:
            continue
        if (step_bytes(d, tile) <= budget
                and d * seq_len * tile * itemsize <= 2 * 1024 * 1024):
            bb = d

    # Megacore: if a big tensor collapsed to a single grid step, split it so both
    # TensorCores (v7x) get work.
    col_steps = -(-n_cols // tile)
    total_bytes = n_batch * seq_len * n_cols * itemsize
    if (n_batch // bb) * col_steps < 2 and total_bytes >= 4 * 1024 * 1024:
        if bb > 1:
            bb //= 2
            while n_batch % bb:
                bb -= 1
        elif tile >= 256:
            tile = max(128, (tile // 2) // 128 * 128)

    vmem_limit = int(min(max(2 * step_bytes(bb, tile), 16 * 1024 * 1024),
                         min(capacity // 2, 64 * 1024 * 1024)))
    return tile, bb, vmem_limit


def moving_avg(x, kernel_size, stride):
    """Pallas equivalent of the PyTorch moving_avg.forward for x of shape (B, L, C)."""
    B, L, C = x.shape
    pad = (kernel_size - 1) // 2
    padded_len = L + 2 * pad
    out_len = (padded_len - kernel_size) // stride + 1       # AvgPool1d, padding=0
    itemsize = jnp.dtype(x.dtype).itemsize

    presum = 4 if (stride == 1 and kernel_size >= 8) else 1
    chunk_rows = min(8, out_len)

    # Tiny channel counts: fold batch into the lane axis (one extra HBM pass each way,
    # but lane utilisation goes from C/128 to min(B*C,128)/128).  Otherwise run
    # natively on (B, L, C) blocks — no wrapper-side transposes.
    fold = (C % 128 != 0) and (C < 32) and (B > 1)
    if fold:
        x3 = jnp.transpose(x, (1, 0, 2)).reshape(1, L, B * C)
    else:
        x3 = x
    n_batch, _, n_cols = x3.shape

    tile, bb, vmem_limit = _choose_tiling(
        n_batch, L, n_cols, padded_len, out_len, itemsize, presum)

    kernel = functools.partial(
        _moving_avg_kernel, kernel_size=kernel_size, stride=stride, pad=pad,
        seq_len=L, out_len=out_len, presum=presum, chunk_rows=chunk_rows)

    # TODO(synk): tile the time axis (with a k-1 halo) for very long sequences; here
    # the whole series stays in VMEM per block, fine for this module's typical L<=~1k.
    scratch_shapes = [pltpu.VMEM((padded_len, tile), x.dtype)]
    if presum > 1:
        scratch_shapes.append(pltpu.VMEM((padded_len - presum + 1, tile), jnp.float32))

    n_adds = (out_len * (kernel_size // presum + kernel_size % presum)
              + (presum - 1) * padded_len)
    cost = pl.CostEstimate(
        flops=int(n_batch * n_cols * (n_adds + out_len)),
        transcendentals=0,
        bytes_accessed=int(n_batch * n_cols * (L + out_len) * itemsize))

    # NOTE: when n_cols is not a multiple of `tile`, the ragged last block reads
    # garbage lanes that feed the accumulator; this is benign because the matching
    # output lanes are masked on store.
    out3 = pl.pallas_call(
        kernel,
        out_shape=jax.ShapeDtypeStruct((n_batch, out_len, n_cols), x.dtype),
        grid=(n_batch // bb, pl.cdiv(n_cols, tile)),
        in_specs=[pl.BlockSpec((bb, L, tile), lambda i, j: (i, 0, j))],
        out_specs=pl.BlockSpec((bb, out_len, tile), lambda i, j: (i, 0, j)),
        scratch_shapes=scratch_shapes,
        compiler_params=pltpu.CompilerParams(
            dimension_semantics=("parallel", "parallel"),
            vmem_limit_bytes=vmem_limit),
        cost_estimate=cost,
    )(x3)

    if fold:
        return jnp.transpose(out3.reshape(out_len, B, C), (1, 0, 2))
    return out3


def _moving_avg_ref(x, kernel_size, stride):
    """Pure-JAX reference (same math as the PyTorch module)."""
    pad = (kernel_size - 1) // 2
    xp = jnp.concatenate(
        [jnp.repeat(x[:, :1, :], pad, axis=1), x,
         jnp.repeat(x[:, -1:, :], pad, axis=1)], axis=1)
    out_len = (xp.shape[1] - kernel_size) // stride + 1
    return jnp.stack(
        [xp[:, t * stride: t * stride + kernel_size, :].mean(axis=1)
         for t in range(out_len)], axis=1)


if __name__ == "__main__":
    key = jax.random.PRNGKey(0)
    cases = [
        # (B, L, C, kernel_size, stride)
        (2, 16, 8, 5, 1),      # tiny: folded lane-dense path, small k unrolled
        (4, 96, 32, 25, 1),    # Autoformer-like: native path, radix-4 presum combine
        (2, 32, 128, 7, 1),    # lane-dense channels, direct path, batch-blocked
        (2, 64, 8, 6, 2),      # stride > 1: static strided-window path
        (8, 192, 256, 25, 1),  # bigger: batch-blocked, fori chunk loop + presum
    ]
    for idx, (B, L, C, ksz, st) in enumerate(cases):
        key, sub = jax.random.split(key)
        x = jax.random.normal(sub, (B, L, C), dtype=jnp.float32)
        out = jax.block_until_ready(moving_avg(x, ksz, st))
        ref = _moving_avg_ref(x, ksz, st)
        assert out.shape == ref.shape, (idx, out.shape, ref.shape)
        assert jnp.allclose(out, ref, atol=3e-5, rtol=1e-5), f"mismatch in case {idx}"
    print("KERNEL_OK")
</pallas_src>

<mosaic_0001>
module attributes {stable_mosaic.version = 11 : i64} {
  func.func @_moving_avg_kernel(%arg0: i32, %arg1: i32, %arg2: memref<1x16x16xf32, #tpu.memory_space<vmem>>, %arg3: memref<1x16x16xf32, #tpu.memory_space<vmem>>, %arg4: memref<20x16xf32, #tpu.memory_space<vmem>>) attributes {dimension_semantics = [#tpu.dimension_semantics<parallel>, #tpu.dimension_semantics<parallel>], iteration_bounds = array<i64: 1, 1>, scalar_prefetch = 0 : i64, scratch_operands = 1 : i64, tpu.core_type = #tpu.core_type<tc>, window_params = [{transform_indices = @transform_0, window_bounds = array<i64: 1, 16, 16>}, {transform_indices = @transform_1, window_bounds = array<i64: 1, 16, 16>}]} {
    %c0 = arith.constant 0 : index
    %c0_0 = arith.constant 0 : index
    %c0_1 = arith.constant 0 : index
    %0 = vector.load %arg2[%c0, %c0_0, %c0_1] : memref<1x16x16xf32, #tpu.memory_space<vmem>>, vector<1x16x16xf32>
    %1 = vector.shape_cast %0 : vector<1x16x16xf32> to vector<16x16xf32>
    %c2 = arith.constant 2 : index
    %c0_2 = arith.constant 0 : index
    %2 = vector.load %arg4[%c2, %c0_2] : memref<20x16xf32, #tpu.memory_space<vmem>>, vector<16x16xf32>
    tpu.vector_store %arg4[%c2, %c0_2], %1 {strides = array<i32>} : memref<20x16xf32, #tpu.memory_space<vmem>>, vector<16x16xf32>,
    %c0_3 = arith.constant 0 : index
    %c0_4 = arith.constant 0 : index
    %c0_5 = arith.constant 0 : index
    %3 = vector.load %arg2[%c0_3, %c0_4, %c0_5] : memref<1x16x16xf32, #tpu.memory_space<vmem>>, vector<1x1x16xf32>
    %4 = vector.shape_cast %3 : vector<1x1x16xf32> to vector<1x16xf32>
    %c0_6 = arith.constant 0 : index
    %c15 = arith.constant 15 : index
    %c0_7 = arith.constant 0 : index
    %5 = vector.load %arg2[%c0_6, %c15, %c0_7] : memref<1x16x16xf32, #tpu.memory_space<vmem>>, vector<1x1x16xf32>
    %6 = vector.shape_cast %5 : vector<1x1x16xf32> to vector<1x16xf32>
    %7 = vector.shape_cast %4 : vector<1x16xf32> to vector<1x16xf32>
    %8 = vector.broadcast %7 : vector<1x16xf32> to vector<2x16xf32>
    %c0_8 = arith.constant 0 : index
    %c0_9 = arith.constant 0 : index
    %9 = vector.load %arg4[%c0_8, %c0_9] : memref<20x16xf32, #tpu.memory_space<vmem>>, vector<2x16xf32>
    tpu.vector_store %arg4[%c0_8, %c0_9], %8 {strides = array<i32>} : memref<20x16xf32, #tpu.memory_space<vmem>>, vector<2x16xf32>,
    %10 = vector.shape_cast %6 : vector<1x16xf32> to vector<1x16xf32>
    %11 = vector.broadcast %10 : vector<1x16xf32> to vector<2x16xf32>
    %c18 = arith.constant 18 : index
    %c0_10 = arith.constant 0 : index
    %12 = vector.load %arg4[%c18, %c0_10] : memref<20x16xf32, #tpu.memory_space<vmem>>, vector<2x16xf32>
    tpu.vector_store %arg4[%c18, %c0_10], %11 {strides = array<i32>} : memref<20x16xf32, #tpu.memory_space<vmem>>, vector<2x16xf32>,
    %cst = arith.constant 0.000000e+00 : f32
    %13 = vector.broadcast %cst : f32 to vector<8x16xf32>
    %c0_11 = arith.constant 0 : index
    %c0_12 = arith.constant 0 : index
    %14 = vector.load %arg4[%c0_11, %c0_12] : memref<20x16xf32, #tpu.memory_space<vmem>>, vector<8x16xf32>
    %15 = arith.addf %13, %14 : vector<8x16xf32>
    %c1 = arith.constant 1 : index
    %c0_13 = arith.constant 0 : index
    %16 = vector.load %arg4[%c1, %c0_13] : memref<20x16xf32, #tpu.memory_space<vmem>>, vector<8x16xf32>
    %17 = arith.addf %15, %16 : vector<8x16xf32>
    %c2_14 = arith.constant 2 : index
    %c0_15 = arith.constant 0 : index
    %18 = vector.load %arg4[%c2_14, %c0_15] : memref<20x16xf32, #tpu.memory_space<vmem>>, vector<8x16xf32>
    %19 = arith.addf %17, %18 : vector<8x16xf32>
    %c3 = arith.constant 3 : index
    %c0_16 = arith.constant 0 : index
    %20 = vector.load %arg4[%c3, %c0_16] : memref<20x16xf32, #tpu.memory_space<vmem>>, vector<8x16xf32>
    %21 = arith.addf %19, %20 : vector<8x16xf32>
    %c4 = arith.constant 4 : index
    %c0_17 = arith.constant 0 : index
    %22 = vector.load %arg4[%c4, %c0_17] : memref<20x16xf32, #tpu.memory_space<vmem>>, vector<8x16xf32>
    %23 = arith.addf %21, %22 : vector<8x16xf32>
    %cst_18 = arith.constant 2.000000e-01 : f32
    %24 = vector.broadcast %cst_18 : f32 to vector<8x16xf32>
    %25 = arith.mulf %23, %24 : vector<8x16xf32>
    %c0_19 = arith.constant 0 : index
    %c0_20 = arith.constant 0 : index
    %c0_21 = arith.constant 0 : index
    %26 = vector.load %arg3[%c0_19, %c0_20, %c0_21] : memref<1x16x16xf32, #tpu.memory_space<vmem>>, vector<1x8x16xf32>
    %27 = vector.shape_cast %26 : vector<1x8x16xf32> to vector<8x16xf32>
    %28 = vector.shape_cast %25 : vector<8x16xf32> to vector<1x8x16xf32>
    tpu.vector_store %arg3[%c0_19, %c0_20, %c0_21], %28 {strides = array<i32>} : memref<1x16x16xf32, #tpu.memory_space<vmem>>, vector<1x8x16xf32>,
    %cst_22 = arith.constant 0.000000e+00 : f32
    %29 = vector.broadcast %cst_22 : f32 to vector<8x16xf32>
    %c8 = arith.constant 8 : index
    %c0_23 = arith.constant 0 : index
    %30 = vector.load %arg4[%c8, %c0_23] : memref<20x16xf32, #tpu.memory_space<vmem>>, vector<8x16xf32>
    %31 = arith.addf %29, %30 : vector<8x16xf32>
    %c9 = arith.constant 9 : index
    %c0_24 = arith.constant 0 : index
    %32 = vector.load %arg4[%c9, %c0_24] : memref<20x16xf32, #tpu.memory_space<vmem>>, vector<8x16xf32>
    %33 = arith.addf %31, %32 : vector<8x16xf32>
    %c10 = arith.constant 10 : index
    %c0_25 = arith.constant 0 : index
    %34 = vector.load %arg4[%c10, %c0_25] : memref<20x16xf32, #tpu.memory_space<vmem>>, vector<8x16xf32>
    %35 = arith.addf %33, %34 : vector<8x16xf32>
    %c11 = arith.constant 11 : index
    %c0_26 = arith.constant 0 : index
    %36 = vector.load %arg4[%c11, %c0_26] : memref<20x16xf32, #tpu.memory_space<vmem>>, vector<8x16xf32>
    %37 = arith.addf %35, %36 : vector<8x16xf32>
    %c12 = arith.constant 12 : index
    %c0_27 = arith.constant 0 : index
    %38 = vector.load %arg4[%c12, %c0_27] : memref<20x16xf32, #tpu.memory_space<vmem>>, vector<8x16xf32>
    %39 = arith.addf %37, %38 : vector<8x16xf32>
    %cst_28 = arith.constant 2.000000e-01 : f32
    %40 = vector.broadcast %cst_28 : f32 to vector<8x16xf32>
    %41 = arith.mulf %39, %40 : vector<8x16xf32>
    %c0_29 = arith.constant 0 : index
    %c8_30 = arith.constant 8 : index
    %c0_31 = arith.constant 0 : index
    %42 = vector.load %arg3[%c0_29, %c8_30, %c0_31] : memref<1x16x16xf32, #tpu.memory_space<vmem>>, vector<1x8x16xf32>
    %43 = vector.shape_cast %42 : vector<1x8x16xf32> to vector<8x16xf32>
    %44 = vector.shape_cast %41 : vector<8x16xf32> to vector<1x8x16xf32>
    tpu.vector_store %arg3[%c0_29, %c8_30, %c0_31], %44 {strides = array<i32>} : memref<1x16x16xf32, #tpu.memory_space<vmem>>, vector<1x8x16xf32>,
    return
  }
  func.func @transform_0(%arg0: i32, %arg1: i32) -> (i32, i32, i32) {
    %c0_i32 = arith.constant 0 : i32
    %c0_i32_0 = arith.constant 0 : i32
    return %arg0, %c0_i32, %arg1 : i32, i32, i32
  }
  func.func @transform_1(%arg0: i32, %arg1: i32) -> (i32, i32, i32) {
    %c0_i32 = arith.constant 0 : i32
    %c0_i32_0 = arith.constant 0 : i32
    return %arg0, %c0_i32, %arg1 : i32, i32, i32
  }
}

</mosaic_0001>

<llo_original>
// kernel: tpu_custom_call.1
$region0: #{tpu_custom_call.1}
  #allocation0 [shape = 'u32[]', space=smem, size = 0x4, offset = 0x4, fixed_abs, tag = 'smem constant byte address 0x4 - core index']
  #allocation1 [shape = 'u32[72,128]{1,0:T(1,128)}', space=vmem, size = 0x9000, scoped, tag = 'internal scratch']
  #allocation2 [shape = 'f32[20,16]{1,0:T(8,128)}', space=vmem, size = 0x3000, scoped, tag = 'scratch operand']
  %s0 = inlined_call_operand.hbm [shape: f32[1,16,16], index: 0, kind: input, shape index: {}]
  %s1 = inlined_call_operand.hbm [shape: f32[1,16,16], index: 1, kind: output, shape index: {}]
  %s2 = sld [smem:[#allocation0]]
  $region18: #{tpu_custom_call.1} parent=0
    _
  %s4 = ssub.s32 1, %s2
  %s5 = scalar_select 0, %s4, %s2
  $region1: #{tpu_custom_call.1} parent=0
    #allocation3 [shape = 'u8[8192]{0}', space=vmem, size = 0x2000, scoped, tag = 'input window, operand 0, single buffered']
    #allocation4 [shape = 's32[1]{0}', space=sflag, size = 0x4, scoped, tag = 'scoped memory for tpu_custom_call.1']
    #allocation5 [shape = 's32[1]{0}', space=sflag, size = 0x4, scoped, tag = 'scoped memory for tpu_custom_call.1']
    #allocation6 [shape = 'u8[8192]{0}', space=vmem, size = 0x2000, scoped, tag = 'output window, operand 0, single buffered']
    %6 = vsyncpa [#allocation4], 0
    %7 = vsyncpa [#allocation5], 0
    // Predicated region
    $region2: #{tpu_custom_call.1} parent=1 // pred_check
      _
    $region3: #{tpu_custom_call.1} parent=1 // pred_check_branch
      %9 = sbr.rel (0) target = $region5
    $region4: #{tpu_custom_call.1} parent=1 // pred_region
      %11 = vsyncadd [#allocation4], 0
      %s12 = sshll.u32 %s0, 4
      %s13 = int_to_ptr.hbm [resolvable:$true] %s12
      %s14 = sshll.u32 [#allocation3], 4
      %s15 = int_to_ptr.vmem [resolvable:$true] %s14
      %20 = dma.hbm_to_vmem [thread:$0]  %s13, 256, %s15, [#allocation4], 128, 128, 8
    $region5: #{tpu_custom_call.1} parent=1 // pred_fallthru
      _
    // Predicated region
    $region6: #{tpu_custom_call.1} parent=1 // pred_check
      _
    $region7: #{tpu_custom_call.1} parent=1 // pred_check_branch
      %22 = sbr.rel (0) target = $region9
    $region8: #{tpu_custom_call.1} parent=1 // pred_region
      %24 = dma.done [#allocation4], 256
    $region9: #{tpu_custom_call.1} parent=1 // pred_fallthru
      _
    %v25 = vld [vmem:[#allocation3] sm:$0xff]
    %v26 = vld [vmem:[#allocation3 + $0x8] sm:$0xff]
    %vm27 = vcmask 130048
    %28 = vst.msk [vmem:[#allocation2 + $0x2] sm:$0xff] %vm27, %v25
    %29 = vst.msk [vmem:[#allocation2 + $0xa] sm:$0xff] %vm27, %v26
    %v30 = vld [vmem:[#allocation3] sm:$0x1]
    %v31 = vld [vmem:[#allocation3 + $0xf] sm:$0x1]
    %v32 = vperm.slane %v30, 0
    %vm33 = vcmask 123904
    %34 = vst.msk [vmem:[#allocation2] sm:$0x3] %vm33, %v32
    %v35 = vperm.slane %v31, 0
    %36 = vst.msk [vmem:[#allocation2 + $0x12] sm:$0x3] %vm33, %v35
    %v37 = vld [vmem:[#allocation2] sm:$0xff]
    %v38 = vadd.f32 %v37, 0.0
    %v39 = vld [vmem:[#allocation2 + $0x1] sm:$0xff]
    %v40 = vadd.f32 %v38, %v39
    %v41 = vld [vmem:[#allocation2 + $0x2] sm:$0xff]
    %v42 = vadd.f32 %v40, %v41
    %v43 = vld [vmem:[#allocation2 + $0x3] sm:$0xff]
    %v44 = vadd.f32 %v42, %v43
    %v45 = vld [vmem:[#allocation2 + $0x4] sm:$0xff]
    %v46 = vadd.f32 %v44, %v45
    %v47 = vmul.f32 %v46, 0.2
    %48 = vst.msk [vmem:[#allocation6] sm:$0xff] %vm27, %v47
    %v49 = vld [vmem:[#allocation2 + $0x8] sm:$0xff]
    %v50 = vadd.f32 %v49, 0.0
    %v51 = vld [vmem:[#allocation2 + $0x9] sm:$0xff]
    %v52 = vadd.f32 %v50, %v51
    %v53 = vld [vmem:[#allocation2 + $0xa] sm:$0xff]
    %v54 = vadd.f32 %v52, %v53
    %v55 = vld [vmem:[#allocation2 + $0xb] sm:$0xff]
    %v56 = vadd.f32 %v54, %v55
    %v57 = vld [vmem:[#allocation2 + $0xc] sm:$0xff]
    %v58 = vadd.f32 %v56, %v57
    %v59 = vmul.f32 %v58, 0.2
    %60 = vst.msk [vmem:[#allocation6 + $0x8] sm:$0xff] %vm27, %v59
    // Predicated region
    $region10: #{tpu_custom_call.1} parent=1 // pred_check
      _
    $region11: #{tpu_custom_call.1} parent=1 // pred_check_branch
      %62 = sbr.rel (0) target = $region13
    $region12: #{tpu_custom_call.1} parent=1 // pred_region
      %64 = vsyncadd [#allocation5], 0
      %s65 = sshll.u32 [#allocation6], 4
      %s66 = int_to_ptr.vmem [resolvable:$true] %s65
      %s67 = sshll.u32 %s1, 4
      %s68 = int_to_ptr.hbm [resolvable:$true] %s67
      %73 = dma.vmem_to_hbm [thread:$0]  %s66, 256, %s68, [#allocation5], 128, 128, 8
    $region13: #{tpu_custom_call.1} parent=1 // pred_fallthru
      _
    // Predicated region
    $region14: #{tpu_custom_call.1} parent=1 // pred_check
      _
    $region15: #{tpu_custom_call.1} parent=1 // pred_check_branch
      %75 = sbr.rel (0) target = $region17
    $region16: #{tpu_custom_call.1} parent=1 // pred_region
      %77 = dma.done [#allocation5], 256
    $region17: #{tpu_custom_call.1} parent=1 // pred_fallthru
      _
    %78 = vsyncpa [#allocation4], 1
    %79 = vsyncpa [#allocation5], 1

</llo_original>
